<compile_context>
chip_gen: v5e
topology: v5e:2x2
jax: 0.10.0
libtpu: 0.0.40
codegen_flags: <defaults>
</compile_context>

<pallas_src>
import functools

import jax
import jax.numpy as jnp
import numpy as np
from jax.experimental import pallas as pl
from jax.experimental.pallas import tpu as pltpu


def _round_up(x: int, m: int) -> int:
    return (x + m - 1) // m * m


def _cdiv(a: int, b: int) -> int:
    return -(-a // b)


# ---------------------------------------------------------------------------
# Pallas kernel: out[f, n] = feat[f, n] * smoothed[0, n]
# featT_ref : (F, TILE_N)   feature tile, node axis on lanes (lane-dense)
# sm_ref    : (1, TILE_N)   per-node smoothed weight (float32), broadcast on sublanes
# ---------------------------------------------------------------------------
def _mask_kernel(featT_ref, sm_ref, out_ref):
    x = featT_ref[...]
    sm = sm_ref[...]  # (1, TILE_N) float32
    if out_ref.dtype == jnp.float32:
        out_ref[...] = x * sm
    else:
        # Explicit f32 upcast only for sub-f32 feature dtypes (e.g. bf16).
        out_ref[...] = (x.astype(jnp.float32) * sm).astype(out_ref.dtype)


def _smooth_weights(feat_weight: jnp.ndarray, window_size: int) -> jnp.ndarray:
    """sigmoid -> zero-padded sliding mean. O(N*window); matches F.pad + F.conv1d."""
    left = window_size // 2
    right = window_size - left - 1
    n = feat_weight.shape[0]
    s = jax.nn.sigmoid(feat_weight.astype(jnp.float32))
    padded = jnp.pad(s, (left, right))
    acc = padded[0:n]
    for k in range(1, window_size):
        acc = acc + padded[k:k + n]
    return acc / float(window_size)


def _choose_tile_n(n_total: int, f: int, itemsize: int) -> tuple[int, int]:
    """Lane tile (multiple of 128, ~1 MiB of features/tile) and padded node count."""
    target = max(128, min(4096, ((1 << 20) // max(1, f * itemsize)) // 128 * 128))
    n_pad_min = _round_up(n_total, 128)
    num_tiles = max(1, _cdiv(n_pad_min, target))
    tile = _round_up(_cdiv(n_pad_min, num_tiles), 128)
    return tile, tile * num_tiles


@functools.partial(
    jax.jit, static_argnames=("window_size", "tile_n", "train1", "train2"))
def explain_masked_feats(feat1, w1, feat2, w2, *, window_size=5, tile_n=None,
                         train1=True, train2=True):
    """Fused Pallas implementation of
         masked_i = feat_i * smooth(sigmoid(w_i), window)[:, None]   for i in {1, 2}.
    Untrained proteins use an identity (x1.0, bit-exact) mask so a single fused call
    covers every flag combination.  Returns (masked1, masked2, sm1, sm2)."""
    n1, f = feat1.shape
    n2, f2 = feat2.shape
    assert f == f2, "both proteins must share the feature dimension"
    assert feat1.dtype == feat2.dtype
    dtype = feat1.dtype
    n_total = n1 + n2

    # Per-protein smoothing (so the window never bleeds across the protein boundary).
    sm1 = _smooth_weights(w1, window_size) if train1 else jnp.ones((n1,), jnp.float32)
    sm2 = _smooth_weights(w2, window_size) if train2 else jnp.ones((n2,), jnp.float32)

    if tile_n is None:
        tile, n_pad = _choose_tile_n(n_total, f, jnp.dtype(dtype).itemsize)
    else:
        assert tile_n % 128 == 0, "tile_n must be a multiple of 128 (lane width)"
        tile = tile_n
        n_pad = _round_up(n_total, tile)
    num_tiles = n_pad // tile

    # Transposed + concatenated + padded layout: node axis on lanes (lane-dense
    # regardless of F).  Transposes here are wrapper-side layout plumbing.
    featT = jnp.concatenate([feat1.T, feat2.T], axis=1)          # (F, n_total)
    featT = jnp.pad(featT, ((0, 0), (0, n_pad - n_total)))
    sm_row = jnp.concatenate([sm1, sm2])[None, :]                # (1, n_total) f32
    sm_row = jnp.pad(sm_row, ((0, 0), (0, n_pad - n_total)))

    maskedT = pl.pallas_call(
        _mask_kernel,
        out_shape=jax.ShapeDtypeStruct((f, n_pad), dtype),
        grid=(num_tiles,),
        in_specs=[
            pl.BlockSpec((f, tile), lambda i: (0, i)),   # feature tile
            pl.BlockSpec((1, tile), lambda i: (0, i)),   # per-node smoothed weights
        ],
        out_specs=pl.BlockSpec((f, tile), lambda i: (0, i)),
        compiler_params=pltpu.CompilerParams(
            dimension_semantics=("parallel",)),          # v7x: split tiles across TCs
    )(featT, sm_row)

    masked1 = maskedT[:, :n1].T
    masked2 = maskedT[:, n1:n_total].T
    return masked1, masked2, sm1[:, None], sm2[:, None]


def explain_module_forward(
    protein1_feat, protein2_feat,
    protein1_feat_weight, protein2_feat_weight,
    protein1_feat_train: bool = True, protein2_feat_train: bool = True,
    window_size: int = 5,
):
    """Mirrors ExplainModule.forward up to (but excluding) the external model call."""
    p1_masked, p2_masked, p1_sm, p2_sm = explain_masked_feats(
        protein1_feat, protein1_feat_weight,
        protein2_feat, protein2_feat_weight,
        window_size=window_size,
        train1=protein1_feat_train, train2=protein2_feat_train)
    if not protein1_feat_train:
        p1_sm = None
    if not protein2_feat_train:
        p2_sm = None
    # TODO(synk): ypred = self.model(pair_idx, p1_masked, edge_index1, batch1,
    #                                p2_masked, edge_index2, batch2, None, None)
    return p1_masked, p2_masked, p1_sm, p2_sm


def _reference_smooth_and_mask(feat_weight, feat, window_size=5):
    """Pure-JAX reference matching the PyTorch smooth_weights + multiply."""
    left = window_size // 2
    right = window_size - left - 1
    s = jax.nn.sigmoid(feat_weight.astype(jnp.float32))
    padded = jnp.pad(s, (left, right))
    kern = jnp.ones((window_size,), jnp.float32) / window_size
    smoothed = jnp.convolve(padded, kern, mode="valid")
    return feat * smoothed[:, None], smoothed[:, None]


if __name__ == "__main__":
    key = jax.random.PRNGKey(0)
    k1, k2, k3, k4 = jax.random.split(key, 4)

    # Small synthetic shapes consistent with the module:
    #   Protein{1,2}_feat: [num_nodes, feat_dim], feat_weight: [num_nodes], window=5.
    N1, N2, F = 200, 184, 32
    window_size = 5

    protein1_feat = jax.random.normal(k1, (N1, F), dtype=jnp.float32)
    protein2_feat = jax.random.normal(k2, (N2, F), dtype=jnp.float32)
    # construct_feat_weight: uniform(a=0, b=0.2)
    protein1_feat_weight = jax.random.uniform(k3, (N1,), jnp.float32, minval=0.0, maxval=0.2)
    protein2_feat_weight = jax.random.uniform(k4, (N2,), jnp.float32, minval=0.0, maxval=0.2)

    # (1) Default auto-tiled path (single ~1 MiB tile at these sizes).
    p1_masked, p2_masked, p1_sm, p2_sm = explain_module_forward(
        protein1_feat, protein2_feat,
        protein1_feat_weight, protein2_feat_weight,
        protein1_feat_train=True, protein2_feat_train=True,
        window_size=window_size)
    jax.block_until_ready((p1_masked, p2_masked, p1_sm, p2_sm))

    # (2) Force multiple grid tiles (tile_n=128 -> 3 node tiles) to exercise the
    #     pipelined multi-tile / "parallel" grid path as well.
    p1_m_t, p2_m_t, _, _ = explain_masked_feats(
        protein1_feat, protein1_feat_weight,
        protein2_feat, protein2_feat_weight,
        window_size=window_size, tile_n=128)
    jax.block_until_ready((p1_m_t, p2_m_t))

    # Correctness check against a pure-JAX reference of the PyTorch math.
    ref1, rsm1 = _reference_smooth_and_mask(protein1_feat_weight, protein1_feat, window_size)
    ref2, rsm2 = _reference_smooth_and_mask(protein2_feat_weight, protein2_feat, window_size)
    np.testing.assert_allclose(np.asarray(p1_sm), np.asarray(rsm1), rtol=1e-5, atol=1e-6)
    np.testing.assert_allclose(np.asarray(p2_sm), np.asarray(rsm2), rtol=1e-5, atol=1e-6)
    np.testing.assert_allclose(np.asarray(p1_masked), np.asarray(ref1), rtol=1e-5, atol=1e-6)
    np.testing.assert_allclose(np.asarray(p2_masked), np.asarray(ref2), rtol=1e-5, atol=1e-6)
    np.testing.assert_allclose(np.asarray(p1_m_t), np.asarray(ref1), rtol=1e-5, atol=1e-6)
    np.testing.assert_allclose(np.asarray(p2_m_t), np.asarray(ref2), rtol=1e-5, atol=1e-6)

    print("KERNEL_OK")
</pallas_src>

<mosaic_0001>
module attributes {stable_mosaic.version = 11 : i64} {
  func.func @_mask_kernel(%arg0: i32, %arg1: memref<32x384xf32, #tpu.memory_space<vmem>>, %arg2: memref<1x384xf32, #tpu.memory_space<vmem>>, %arg3: memref<32x384xf32, #tpu.memory_space<vmem>>) attributes {dimension_semantics = [#tpu.dimension_semantics<parallel>], iteration_bounds = array<i64: 1>, scalar_prefetch = 0 : i64, scratch_operands = 0 : i64, tpu.core_type = #tpu.core_type<tc>, window_params = [{transform_indices = @transform_0, window_bounds = array<i64: 32, 384>}, {transform_indices = @transform_1, window_bounds = array<i64: 1, 384>}, {transform_indices = @transform_2, window_bounds = array<i64: 32, 384>}]} {
    %c0 = arith.constant 0 : index
    %c0_0 = arith.constant 0 : index
    %0 = vector.load %arg1[%c0, %c0_0] : memref<32x384xf32, #tpu.memory_space<vmem>>, vector<32x384xf32>
    %c0_1 = arith.constant 0 : index
    %c0_2 = arith.constant 0 : index
    %1 = vector.load %arg2[%c0_1, %c0_2] : memref<1x384xf32, #tpu.memory_space<vmem>>, vector<1x384xf32>
    %2 = vector.broadcast %1 : vector<1x384xf32> to vector<32x384xf32>
    %3 = arith.mulf %0, %2 : vector<32x384xf32>
    %c0_3 = arith.constant 0 : index
    %c0_4 = arith.constant 0 : index
    %4 = vector.load %arg3[%c0_3, %c0_4] : memref<32x384xf32, #tpu.memory_space<vmem>>, vector<32x384xf32>
    tpu.vector_store %arg3[%c0_3, %c0_4], %3 {strides = array<i32>} : memref<32x384xf32, #tpu.memory_space<vmem>>, vector<32x384xf32>,
    return
  }
  func.func @transform_0(%arg0: i32) -> (i32, i32) {
    %c0_i32 = arith.constant 0 : i32
    %c0_i32_0 = arith.constant 0 : i32
    return %c0_i32, %arg0 : i32, i32
  }
  func.func @transform_1(%arg0: i32) -> (i32, i32) {
    %c0_i32 = arith.constant 0 : i32
    %c0_i32_0 = arith.constant 0 : i32
    return %c0_i32, %arg0 : i32, i32
  }
  func.func @transform_2(%arg0: i32) -> (i32, i32) {
    %c0_i32 = arith.constant 0 : i32
    %c0_i32_0 = arith.constant 0 : i32
    return %c0_i32, %arg0 : i32, i32
  }
}

</mosaic_0001>

<llo_original>
// kernel: explain_masked_feats.1
$region0: #{explain_masked_feats.1}
  #allocation0 [shape = 'u32[]', space=smem, size = 0x4, offset = 0x4, fixed_abs, tag = 'smem constant byte address 0x4 - core index']
  #allocation1 [shape = 'u32[72,128]{1,0:T(1,128)}', space=vmem, size = 0x9000, scoped, tag = 'internal scratch']
  %s0 = inlined_call_operand.vmem [shape: f32[32,384], index: 0, kind: input, shape index: {}]
  %s1 = inlined_call_operand.vmem [shape: f32[1,384], index: 1, kind: input, shape index: {}]
  %s2 = inlined_call_operand.vmem [shape: f32[32,384], index: 2, kind: output, shape index: {}]
  %s3 = sld [smem:[#allocation0]]
  $region18: #{explain_masked_feats.1} parent=0
    _
  %s5 = ssub.s32 1, %s3
  %s6 = scalar_select 0, %s5, %s3
  // Predicated region
  $region2: #{explain_masked_feats.1} parent=0 // pred_check
    _
  $region3: #{explain_masked_feats.1} parent=0 // pred_check_branch
    %8 = sbr.rel (0) target = $region5
  $region4: #{explain_masked_feats.1} parent=0 // pred_region
    _
  $region5: #{explain_masked_feats.1} parent=0 // pred_fallthru
    _
  // Predicated region
  $region6: #{explain_masked_feats.1} parent=0 // pred_check
    _
  $region7: #{explain_masked_feats.1} parent=0 // pred_check_branch
    %10 = sbr.rel (0) target = $region9
  $region8: #{explain_masked_feats.1} parent=0 // pred_region
    _
  $region9: #{explain_masked_feats.1} parent=0 // pred_fallthru
    _
  %v11 = vld [vmem:[%s0] sm:$0xff]
  %v12 = vld [vmem:[%s0 + $0x8] sm:$0xff]
  %v13 = vld [vmem:[%s0 + $0x10] sm:$0xff]
  %v14 = vld [vmem:[%s0 + $0x18] sm:$0xff]
  %v15 = vld [vmem:[%s0 + $0x20] sm:$0xff]
  %v16 = vld [vmem:[%s0 + $0x28] sm:$0xff]
  %v17 = vld [vmem:[%s0 + $0x30] sm:$0xff]
  %v18 = vld [vmem:[%s0 + $0x38] sm:$0xff]
  %v19 = vld [vmem:[%s0 + $0x40] sm:$0xff]
  %v20 = vld [vmem:[%s0 + $0x48] sm:$0xff]
  %v21 = vld [vmem:[%s0 + $0x50] sm:$0xff]
  %v22 = vld [vmem:[%s0 + $0x58] sm:$0xff]
  %v23 = vld [vmem:[%s1] sm:$0x7]
  %v25 = vperm.slane %v23, 0
  %v26 = vperm.slane %v23, 1
  %v27 = vperm.slane %v23, 2
  %v31 = vmul.f32 %v11, %v25
  %v32 = vmul.f32 %v12, %v26
  %v33 = vmul.f32 %v13, %v27
  %v34 = vmul.f32 %v14, %v25
  %v35 = vmul.f32 %v15, %v26
  %v36 = vmul.f32 %v16, %v27
  %v37 = vmul.f32 %v17, %v25
  %v38 = vmul.f32 %v18, %v26
  %v39 = vmul.f32 %v19, %v27
  %v40 = vmul.f32 %v20, %v25
  %v41 = vmul.f32 %v21, %v26
  %v42 = vmul.f32 %v22, %v27
  %43 = vst [vmem:[%s2] sm:$0xff] %v31
  %44 = vst [vmem:[%s2 + $0x8] sm:$0xff] %v32
  %45 = vst [vmem:[%s2 + $0x10] sm:$0xff] %v33
  %46 = vst [vmem:[%s2 + $0x18] sm:$0xff] %v34
  %47 = vst [vmem:[%s2 + $0x20] sm:$0xff] %v35
  %48 = vst [vmem:[%s2 + $0x28] sm:$0xff] %v36
  %49 = vst [vmem:[%s2 + $0x30] sm:$0xff] %v37
  %50 = vst [vmem:[%s2 + $0x38] sm:$0xff] %v38
  %51 = vst [vmem:[%s2 + $0x40] sm:$0xff] %v39
  %52 = vst [vmem:[%s2 + $0x48] sm:$0xff] %v40
  %53 = vst [vmem:[%s2 + $0x50] sm:$0xff] %v41
  %54 = vst [vmem:[%s2 + $0x58] sm:$0xff] %v42
  // Predicated region
  $region10: #{explain_masked_feats.1} parent=0 // pred_check
    _
  $region11: #{explain_masked_feats.1} parent=0 // pred_check_branch
    %56 = sbr.rel (0) target = $region13
  $region12: #{explain_masked_feats.1} parent=0 // pred_region
    _
  $region13: #{explain_masked_feats.1} parent=0 // pred_fallthru
    _
  // Predicated region
  $region14: #{explain_masked_feats.1} parent=0 // pred_check
    _
  $region15: #{explain_masked_feats.1} parent=0 // pred_check_branch
    %58 = sbr.rel (0) target = $region17
  $region16: #{explain_masked_feats.1} parent=0 // pred_region
    _
  $region17: #{explain_masked_feats.1} parent=0 // pred_fallthru
    _

</llo_original>
